<compile_context>
chip_gen: v7x
topology: tpu7x:2x2x1
jax: 0.10.0
libtpu: 0.0.40
codegen_flags: <defaults>
</compile_context>

<pallas_src>
import math
import jax
import jax.numpy as jnp
from jax.experimental import pallas as pl
from jax.experimental.pallas import tpu as pltpu


def _gelu_tanh(x):
    # GELU with tanh approximation, matching torch.nn.GELU(approximate='tanh')
    c = math.sqrt(2.0 / math.pi)
    return 0.5 * x * (1.0 + jnp.tanh(c * (x + 0.044715 * x * x * x)))


def _round_up(x, m):
    return (x + m - 1) // m * m


def mlp_kernel(x_ref, w1_ref, b1_ref, w2_ref, b2_ref, o_ref, acc_ref):
    # x_ref: (tm, C) bf16   w1_ref: (C, th) bf16   b1_ref: (1, th) f32
    # w2_ref: (th, C) bf16  b2_ref: (1, C) f32     acc_ref: (tm, C) f32 scratch
    j = pl.program_id(1)

    @pl.when(j == 0)
    def _init():
        # Seed the accumulator with the output bias (added exactly once).
        acc_ref[...] = jnp.broadcast_to(b2_ref[...], acc_ref.shape)

    # c_fc slab -> f32 accumulator, bias + GELU in f32.
    h = jnp.dot(x_ref[...], w1_ref[...], preferred_element_type=jnp.float32)
    h = _gelu_tanh(h + b1_ref[...])

    # c_proj partial product, accumulated in f32 (bf16 operands on the MXU).
    acc_ref[...] += jnp.dot(h.astype(w2_ref.dtype), w2_ref[...],
                            preferred_element_type=jnp.float32)

    @pl.when(j == pl.num_programs(1) - 1)
    def _finalize():
        o_ref[...] = acc_ref[...].astype(o_ref.dtype)


def mlp_forward(x, w1, b1, w2, b2, *, tm=256, compute_dtype=jnp.bfloat16):
    """x: [B, T, C]; w1: [C, H]; b1: [H]; w2: [H, C]; b2: [C]."""
    B, T, C = x.shape
    Cin, H = w1.shape
    assert Cin == C and w2.shape == (H, C) and b1.shape == (H,) and b2.shape == (C,)
    M = B * T

    # Token tile: multiple of 16 (bf16 packs 2 rows/sublane); no larger than needed.
    tm = max(16, min(tm, _round_up(M, 16)))
    M_pad = _round_up(M, tm)

    # Hidden tile: largest "nice" multiple of 128 dividing H, else full H.
    th = next((t for t in (1024, 512, 384, 256, 128) if t <= H and H % t == 0), H)

    x2 = x.reshape(M, C)
    if M_pad != M:
        x2 = jnp.pad(x2, ((0, M_pad - M), (0, 0)))

    xc = x2.astype(compute_dtype)
    w1c = w1.astype(compute_dtype)
    w2c = w2.astype(compute_dtype)
    b1_2 = b1.reshape(1, H).astype(jnp.float32)
    b2_2 = b2.reshape(1, C).astype(jnp.float32)

    n_m = M_pad // tm
    n_h = H // th

    # Scoped-VMEM budget: double-buffered tiles + f32 accumulator, with headroom.
    cbytes = jnp.dtype(compute_dtype).itemsize
    tile_bytes = (2 * (tm * C + C * th + th * C) * cbytes    # x, w1, w2 (double-buf)
                  + 2 * (th + C) * 4                         # biases (double-buf)
                  + 2 * tm * C * x.dtype.itemsize            # output tile (double-buf)
                  + tm * C * 4)                              # accumulator scratch
    vmem_limit = min(64 * 1024 * 1024, max(32 * 1024 * 1024, int(2 * tile_bytes)))

    cost = pl.CostEstimate(
        flops=4 * M_pad * C * H,                             # two matmuls
        transcendentals=M_pad * H,                           # tanh in GELU
        bytes_accessed=(xc.size * cbytes
                        + (w1c.size + w2c.size) * cbytes * n_m
                        + (b1_2.size + b2_2.size) * 4 * n_m
                        + M_pad * C * x.dtype.itemsize))

    out = pl.pallas_call(
        mlp_kernel,
        out_shape=jax.ShapeDtypeStruct((M_pad, C), x.dtype),
        grid_spec=pltpu.PrefetchScalarGridSpec(
            num_scalar_prefetch=0,
            grid=(n_m, n_h),                                 # H (reduction) last
            in_specs=[
                pl.BlockSpec((tm, C), lambda i, j: (i, 0)),  # x tile (reused over j)
                pl.BlockSpec((C, th), lambda i, j: (0, j)),  # c_fc weight slab
                pl.BlockSpec((1, th), lambda i, j: (0, j)),  # c_fc bias slab
                pl.BlockSpec((th, C), lambda i, j: (j, 0)),  # c_proj weight slab
                pl.BlockSpec((1, C), lambda i, j: (0, 0)),   # c_proj bias
            ],
            out_specs=pl.BlockSpec((tm, C), lambda i, j: (i, 0)),
            scratch_shapes=[pltpu.VMEM((tm, C), jnp.float32)],
        ),
        compiler_params=pltpu.CompilerParams(
            dimension_semantics=("parallel", "arbitrary"),
            vmem_limit_bytes=vmem_limit),
        cost_estimate=cost,
    )(xc, w1c, b1_2, w2c, b2_2)

    return out[:M].reshape(B, T, C)


def reference_mlp_f32(x, w1, b1, w2, b2):
    h = _gelu_tanh(jnp.einsum("btc,ch->bth", x, w1) + b1)
    return jnp.einsum("bth,hc->btc", h, w2) + b2


def reference_mlp_bf16(x, w1, b1, w2, b2):
    # Mirrors the kernel's precision: bf16 matmul operands, f32 accumulation/GELU.
    B, T, C = x.shape
    xb = x.reshape(-1, C).astype(jnp.bfloat16)
    h = jnp.dot(xb, w1.astype(jnp.bfloat16),
                preferred_element_type=jnp.float32) + b1
    h = _gelu_tanh(h)
    y = jnp.dot(h.astype(jnp.bfloat16), w2.astype(jnp.bfloat16),
                preferred_element_type=jnp.float32) + b2
    return y.reshape(B, T, C).astype(x.dtype)


if __name__ == "__main__":
    # Config: n_embd = 32, hidden = 4 * n_embd = 128, batch = 2, seq = 8
    B, T, C = 2, 8, 32
    H = 4 * C

    key = jax.random.PRNGKey(0)
    kx, kw1, kb1, kw2, kb2 = jax.random.split(key, 5)

    x = jax.random.normal(kx, (B, T, C), dtype=jnp.float32)
    w1 = jax.random.normal(kw1, (C, H), dtype=jnp.float32) / math.sqrt(C)
    b1 = jax.random.normal(kb1, (H,), dtype=jnp.float32) * 0.01
    w2 = jax.random.normal(kw2, (H, C), dtype=jnp.float32) / math.sqrt(H)
    b2 = jax.random.normal(kb2, (C,), dtype=jnp.float32) * 0.01

    y = mlp_forward(x, w1, b1, w2, b2)
    y = jax.block_until_ready(y)
    assert y.shape == (B, T, C)

    # Precision-matched reference (bf16 matmuls, f32 accumulation).
    y_ref_bf16 = reference_mlp_bf16(x, w1, b1, w2, b2)
    assert jnp.allclose(y, y_ref_bf16, atol=2e-3, rtol=2e-3), "mismatch vs bf16 reference"

    # Loose sanity check against the pure-f32 reference.
    y_ref_f32 = reference_mlp_f32(x, w1, b1, w2, b2)
    assert jnp.allclose(y, y_ref_f32, atol=5e-2, rtol=5e-2), "mismatch vs f32 reference"

    print("KERNEL_OK")
</pallas_src>

<mosaic_0001>
module attributes {stable_mosaic.version = 11 : i64} {
  func.func @mlp_kernel(%arg0: i32, %arg1: i32, %arg2: memref<16x32xbf16, #tpu.memory_space<vmem>>, %arg3: memref<32x128xbf16, #tpu.memory_space<vmem>>, %arg4: memref<1x128xf32, #tpu.memory_space<vmem>>, %arg5: memref<128x32xbf16, #tpu.memory_space<vmem>>, %arg6: memref<1x32xf32, #tpu.memory_space<vmem>>, %arg7: memref<16x32xf32, #tpu.memory_space<vmem>>, %arg8: memref<16x32xf32, #tpu.memory_space<vmem>>) attributes {dimension_semantics = [#tpu.dimension_semantics<parallel>, #tpu.dimension_semantics<arbitrary>], iteration_bounds = array<i64: 1, 1>, scalar_prefetch = 0 : i64, scratch_operands = 1 : i64, tpu.core_type = #tpu.core_type<tc>, window_params = [{transform_indices = @transform_0, window_bounds = array<i64: 16, 32>}, {transform_indices = @transform_1, window_bounds = array<i64: 32, 128>}, {transform_indices = @transform_2, window_bounds = array<i64: 1, 128>}, {transform_indices = @transform_3, window_bounds = array<i64: 128, 32>}, {pipeline_mode = #tpu.pipeline_mode<synchronous>, transform_indices = @transform_4, window_bounds = array<i64: 1, 32>}, {transform_indices = @transform_5, window_bounds = array<i64: 16, 32>}]} {
    %c0_i32 = arith.constant 0 : i32
    %0 = arith.cmpi eq, %arg1, %c0_i32 : i32
    %1 = arith.extui %0 : i1 to i32
    %c0_i32_0 = arith.constant 0 : i32
    %2 = arith.cmpi ne, %1, %c0_i32_0 : i32
    scf.if %2 {
      %c0_19 = arith.constant 0 : index
      %c0_20 = arith.constant 0 : index
      %31 = vector.load %arg6[%c0_19, %c0_20] : memref<1x32xf32, #tpu.memory_space<vmem>>, vector<1x32xf32>
      %32 = vector.shape_cast %31 : vector<1x32xf32> to vector<1x32xf32>
      %33 = vector.broadcast %32 : vector<1x32xf32> to vector<16x32xf32>
      %c0_21 = arith.constant 0 : index
      %c0_22 = arith.constant 0 : index
      %34 = vector.load %arg8[%c0_21, %c0_22] : memref<16x32xf32, #tpu.memory_space<vmem>>, vector<16x32xf32>
      tpu.vector_store %arg8[%c0_21, %c0_22], %33 {strides = array<i32>} : memref<16x32xf32, #tpu.memory_space<vmem>>, vector<16x32xf32>,
    } else {
    }
    %c0 = arith.constant 0 : index
    %c0_1 = arith.constant 0 : index
    %3 = vector.load %arg2[%c0, %c0_1] : memref<16x32xbf16, #tpu.memory_space<vmem>>, vector<16x32xbf16>
    %c0_2 = arith.constant 0 : index
    %c0_3 = arith.constant 0 : index
    %4 = vector.load %arg3[%c0_2, %c0_3] : memref<32x128xbf16, #tpu.memory_space<vmem>>, vector<32x128xbf16>
    %cst = arith.constant dense<0.000000e+00> : vector<16x128xf32>
    %5 = tpu.matmul %3, %4, %cst {dimension_numbers = #tpu.dot_dimension_numbers<[1], [0], [0], [1], [0, 0, 1, 1], [], []>} : vector<16x32xbf16>, vector<32x128xbf16>, vector<16x128xf32> -> vector<16x128xf32>
    %c0_4 = arith.constant 0 : index
    %c0_5 = arith.constant 0 : index
    %6 = vector.load %arg4[%c0_4, %c0_5] : memref<1x128xf32, #tpu.memory_space<vmem>>, vector<1x128xf32>
    %7 = vector.broadcast %6 : vector<1x128xf32> to vector<16x128xf32>
    %8 = arith.addf %5, %7 : vector<16x128xf32>
    %cst_6 = arith.constant 5.000000e-01 : f32
    %9 = vector.broadcast %cst_6 : f32 to vector<16x128xf32>
    %10 = arith.mulf %9, %8 : vector<16x128xf32>
    %cst_7 = arith.constant 4.471500e-02 : f32
    %11 = vector.broadcast %cst_7 : f32 to vector<16x128xf32>
    %12 = arith.mulf %11, %8 : vector<16x128xf32>
    %13 = arith.mulf %12, %8 : vector<16x128xf32>
    %14 = arith.mulf %13, %8 : vector<16x128xf32>
    %15 = arith.addf %8, %14 : vector<16x128xf32>
    %cst_8 = arith.constant 0.797884583 : f32
    %16 = vector.broadcast %cst_8 : f32 to vector<16x128xf32>
    %17 = arith.mulf %16, %15 : vector<16x128xf32>
    %18 = math.tanh %17 : vector<16x128xf32>
    %cst_9 = arith.constant 1.000000e+00 : f32
    %19 = vector.broadcast %cst_9 : f32 to vector<16x128xf32>
    %20 = arith.addf %19, %18 : vector<16x128xf32>
    %21 = arith.mulf %10, %20 : vector<16x128xf32>
    %c0_10 = arith.constant 0 : index
    %c0_11 = arith.constant 0 : index
    %22 = vector.load %arg8[%c0_10, %c0_11] : memref<16x32xf32, #tpu.memory_space<vmem>>, vector<16x32xf32>
    %23 = arith.truncf %21 : vector<16x128xf32> to vector<16x128xbf16>
    %c0_12 = arith.constant 0 : index
    %c0_13 = arith.constant 0 : index
    %24 = vector.load %arg5[%c0_12, %c0_13] : memref<128x32xbf16, #tpu.memory_space<vmem>>, vector<128x32xbf16>
    %cst_14 = arith.constant dense<0.000000e+00> : vector<16x32xf32>
    %25 = tpu.matmul %23, %24, %cst_14 {dimension_numbers = #tpu.dot_dimension_numbers<[1], [0], [0], [1], [0, 0, 1, 1], [], []>} : vector<16x128xbf16>, vector<128x32xbf16>, vector<16x32xf32> -> vector<16x32xf32>
    %26 = arith.addf %22, %25 : vector<16x32xf32>
    %c0_15 = arith.constant 0 : index
    %c0_16 = arith.constant 0 : index
    %27 = vector.load %arg8[%c0_15, %c0_16] : memref<16x32xf32, #tpu.memory_space<vmem>>, vector<16x32xf32>
    tpu.vector_store %arg8[%c0_15, %c0_16], %26 {strides = array<i32>} : memref<16x32xf32, #tpu.memory_space<vmem>>, vector<16x32xf32>,
    %c0_i32_17 = arith.constant 0 : i32
    %28 = arith.cmpi eq, %arg1, %c0_i32_17 : i32
    %29 = arith.extui %28 : i1 to i32
    %c0_i32_18 = arith.constant 0 : i32
    %30 = arith.cmpi ne, %29, %c0_i32_18 : i32
    scf.if %30 {
      %c0_19 = arith.constant 0 : index
      %c0_20 = arith.constant 0 : index
      %31 = vector.load %arg8[%c0_19, %c0_20] : memref<16x32xf32, #tpu.memory_space<vmem>>, vector<16x32xf32>
      %c0_21 = arith.constant 0 : index
      %c0_22 = arith.constant 0 : index
      %32 = vector.load %arg7[%c0_21, %c0_22] : memref<16x32xf32, #tpu.memory_space<vmem>>, vector<16x32xf32>
      tpu.vector_store %arg7[%c0_21, %c0_22], %31 {strides = array<i32>} : memref<16x32xf32, #tpu.memory_space<vmem>>, vector<16x32xf32>,
    } else {
    }
    return
  }
  func.func @transform_0(%arg0: i32, %arg1: i32) -> (i32, i32) {
    %c0_i32 = arith.constant 0 : i32
    %c0_i32_0 = arith.constant 0 : i32
    return %arg0, %c0_i32 : i32, i32
  }
  func.func @transform_1(%arg0: i32, %arg1: i32) -> (i32, i32) {
    %c0_i32 = arith.constant 0 : i32
    %c0_i32_0 = arith.constant 0 : i32
    return %c0_i32, %arg1 : i32, i32
  }
  func.func @transform_2(%arg0: i32, %arg1: i32) -> (i32, i32) {
    %c0_i32 = arith.constant 0 : i32
    %c0_i32_0 = arith.constant 0 : i32
    return %c0_i32, %arg1 : i32, i32
  }
  func.func @transform_3(%arg0: i32, %arg1: i32) -> (i32, i32) {
    %c0_i32 = arith.constant 0 : i32
    %c0_i32_0 = arith.constant 0 : i32
    return %arg1, %c0_i32 : i32, i32
  }
  func.func @transform_4(%arg0: i32, %arg1: i32) -> (i32, i32) {
    %c0_i32 = arith.constant 0 : i32
    %c0_i32_0 = arith.constant 0 : i32
    %c0_i32_1 = arith.constant 0 : i32
    return %c0_i32, %c0_i32_0 : i32, i32
  }
  func.func @transform_5(%arg0: i32, %arg1: i32) -> (i32, i32) {
    %c0_i32 = arith.constant 0 : i32
    %c0_i32_0 = arith.constant 0 : i32
    return %arg0, %c0_i32 : i32, i32
  }
}

</mosaic_0001>

<llo_original>
// kernel: tpu_custom_call.1
$region0: #{tpu_custom_call.1}
  #allocation0 [shape = 'u32[]', space=smem, size = 0x4, offset = 0x4, fixed_abs, tag = 'smem constant byte address 0x4 - core index']
  #allocation1 [shape = 'u32[144,128]{1,0:T(1,128)}', space=vmem, size = 0x12000, scoped, tag = 'internal scratch']
  #allocation2 [shape = 'f32[16,32]{1,0:T(8,128)}', space=vmem, size = 0x2000, scoped, tag = 'scratch operand']
  %s0 = inlined_call_operand.vmem [shape: bf16[16,32], index: 0, kind: input, shape index: {}]
  %s1 = inlined_call_operand.vmem [shape: bf16[32,128], index: 1, kind: input, shape index: {}]
  %s2 = inlined_call_operand.vmem [shape: f32[1,128], index: 2, kind: input, shape index: {}]
  %s3 = inlined_call_operand.vmem [shape: bf16[128,32], index: 3, kind: input, shape index: {}]
  %s4 = inlined_call_operand.vmem [shape: f32[1,32], index: 4, kind: input, shape index: {}]
  %s5 = inlined_call_operand.hbm [shape: f32[16,32], index: 5, kind: output, shape index: {}]
  %s6 = sld [smem:[#allocation0]]
  $region38: #{tpu_custom_call.1} parent=0
    _
  %s8 = ssub.s32 1, %s6
  %s9 = scalar_select 0, %s8, %s6
  $region1: #{tpu_custom_call.1} parent=0
    #allocation3 [shape = 'u8[8192]{0}', space=vmem, size = 0x2000, scoped, tag = 'output window, operand 0, single buffered']
    #allocation4 [shape = 's32[1]{0}', space=sflag, size = 0x4, scoped, tag = 'scoped memory for tpu_custom_call.1']
    %10 = vsyncpa [#allocation4], 0
    // Predicated region
    $region2: #{tpu_custom_call.1} parent=1 // pred_check
      _
    $region3: #{tpu_custom_call.1} parent=1 // pred_check_branch
      %12 = sbr.rel (0) target = $region5
    $region4: #{tpu_custom_call.1} parent=1 // pred_region
      _
    $region5: #{tpu_custom_call.1} parent=1 // pred_fallthru
      _
    // Predicated region
    $region6: #{tpu_custom_call.1} parent=1 // pred_check
      _
    $region7: #{tpu_custom_call.1} parent=1 // pred_check_branch
      %14 = sbr.rel (0) target = $region9
    $region8: #{tpu_custom_call.1} parent=1 // pred_region
      _
    $region9: #{tpu_custom_call.1} parent=1 // pred_fallthru
      _
    // Predicated region
    $region10: #{tpu_custom_call.1} parent=1 // pred_check
      _
    $region11: #{tpu_custom_call.1} parent=1 // pred_check_branch
      %16 = sbr.rel (0) target = $region13
    $region12: #{tpu_custom_call.1} parent=1 // pred_region
      _
    $region13: #{tpu_custom_call.1} parent=1 // pred_fallthru
      _
    // Predicated region
    $region14: #{tpu_custom_call.1} parent=1 // pred_check
      _
    $region15: #{tpu_custom_call.1} parent=1 // pred_check_branch
      %18 = sbr.rel (0) target = $region17
    $region16: #{tpu_custom_call.1} parent=1 // pred_region
      _
    $region17: #{tpu_custom_call.1} parent=1 // pred_fallthru
      _
    // Predicated region
    $region18: #{tpu_custom_call.1} parent=1 // pred_check
      _
    $region19: #{tpu_custom_call.1} parent=1 // pred_check_branch
      %20 = sbr.rel (0) target = $region21
    $region20: #{tpu_custom_call.1} parent=1 // pred_region
      _
    $region21: #{tpu_custom_call.1} parent=1 // pred_fallthru
      _
    %p22 = scmp.eq.s32.totalorder 0, 0
    // Predicated region
    $region22: #{tpu_custom_call.1} parent=1 // pred_check
      %p23 = pneg %p22
    $region23: #{tpu_custom_call.1} parent=1 // pred_check_branch
      %25 = sbr.rel (%p23) target = $region25
    $region24: #{tpu_custom_call.1} parent=1 // pred_region
      %v26 = vld [vmem:[%s4] sm:$0x1]
      %v28 = vlaneseq
      %v29 = vshrl.u32 %v28, 7
      %v30 = vsub.s32 0, %v29
      %v31 = vrot.slane %v26, %v30
      %vm33 = vcmask 261120
      %34 = vst.msk [vmem:[#allocation2] sm:$0xff] %vm33, %v31
      %35 = vst.msk [vmem:[#allocation2 + $0x8] sm:$0xff] %vm33, %v31
    $region25: #{tpu_custom_call.1} parent=1 // pred_fallthru
      _
    %v36 = vld [vmem:[%s0] sm:$0xf]
    %v37 = vld [vmem:[%s0 + $0x4] sm:$0xf]
    %v38 = vld [vmem:[%s1] sm:$0xf]
    %v39 = vld [vmem:[%s1 + $0x4] sm:$0xf]
    %v40 = vld [vmem:[%s1 + $0x8] sm:$0xf]
    %v41 = vld [vmem:[%s1 + $0xc] sm:$0xf]
    %v42 = vld [vmem:[%s2] sm:$0x1]
    %v44 = vlaneseq
    %v45 = vshrl.u32 %v44, 7
    %v46 = vsub.s32 0, %v45
    %v47 = vrot.slane %v42, %v46
    %v51 = vunpack.c.l.b16 %v36
    %v52 = vunpack.c.l.b16 %v37
    %v53 = vpack.c.b16 %v52, %v51
    %v58 = vunpack.c.l.b16 %v38
    %v59 = vunpack.c.l.b16 %v39
    %v60 = vunpack.c.l.b16 %v40
    %v61 = vunpack.c.l.b16 %v41
    %v62 = vpack.c.b16 %v59, %v58
    %v63 = vpack.c.b16 %v61, %v60
    %vm66 = vcmask 261120
    %v68 = vsel %vm66, %v53, 0
    %70 = vmatprep.subr.bf16.mxu0 0
    %71 = vmatpush1.bf16.msra.mxu0 %v62
    %72 = vmatprep.subr.bf16.mxu0 0
    %73 = vmatpush1.bf16.msra.mxu0 %v63
    %74 = vmatprep.subr.bf16.mxu0 0
    %75 = vmatpush1.bf16.msra.mxu0 0
    %76 = vmatprep.subr.bf16.mxu0 0
    %77 = vmatpush1.bf16.msra.mxu0 0
    %78 = vmatprep.subr.bf16.mxu0 0
    %79 = vmatpush1.bf16.msra.mxu0 0
    %80 = vmatprep.subr.bf16.mxu0 0
    %81 = vmatpush1.bf16.msra.mxu0 0
    %82 = vmatprep.subr.bf16.mxu0 0
    %83 = vmatpush1.bf16.msra.mxu0 0
    %84 = vmatprep.subr.bf16.mxu0 0
    %85 = vmatpush1.bf16.msra.mxu0 0
    %86 = vmatprep.subr.bf16.mxu0 0
    %87 = vmatpush1.bf16.msra.mxu0 0
    %88 = vmatprep.subr.bf16.mxu0 0
    %89 = vmatpush1.bf16.msra.mxu0 0
    %90 = vmatprep.subr.bf16.mxu0 0
    %91 = vmatpush1.bf16.msra.mxu0 0
    %92 = vmatprep.subr.bf16.mxu0 0
    %93 = vmatpush1.bf16.msra.mxu0 0
    %94 = vmatprep.subr.bf16.mxu0 0
    %95 = vmatpush1.bf16.msra.mxu0 0
    %96 = vmatprep.subr.bf16.mxu0 0
    %97 = vmatpush1.bf16.msra.mxu0 0
    %98 = vmatprep.subr.bf16.mxu0 0
    %99 = vmatpush1.bf16.msra.mxu0 0
    %100 = vmatprep.subr.bf16.mxu0 0
    %101 = vmatpush1.bf16.msra.mxu0 0
    %102 = vmatprep.mubr.bf16.mxu0 0
    %103 = vmatmul.mubr.bf16.gmra.mrb[0].mxu0 %v68
    %v104 = vpop.f32.mrb[0].mxu0
    %v105 = vadd.f32 %v47, %v104
    %v106 = vpop.f32.mrb[0].mxu0
    %v107 = vpop.f32.mrb[0].mxu0
    %v108 = vadd.f32 %v47, %v107
    %v109 = vpop.f32.mrb[0].mxu0
    %110 = vdwg.mxu0
    %v111 = vmul.f32 %v105, 0.5
    %v112 = vmul.f32 %v108, 0.5
    %v113 = vmul.f32 %v105, 0.044715
    %v114 = vmul.f32 %v108, 0.044715
    %v115 = vmul.f32 %v113, %v105
    %v116 = vmul.f32 %v114, %v108
    %v117 = vmul.f32 %v115, %v105
    %v118 = vmul.f32 %v116, %v108
    %v119 = vadd.f32 %v105, %v117
    %v120 = vadd.f32 %v108, %v118
    %v121 = vmul.f32 %v119, 0.7978846
    %v122 = vmul.f32 %v120, 0.7978846
    %v123 = vtanh.pop %v121
    %v124 = vtanh.pop %v122
    %v125 = vadd.f32 %v123, 1.0
    %v126 = vadd.f32 %v124, 1.0
    %v127 = vmul.f32 %v111, %v125
    %v128 = vmul.f32 %v112, %v126
    %v129 = vld [vmem:[#allocation2] sm:$0xff]
    %v130 = vld [vmem:[#allocation2 + $0x8] sm:$0xff]
    %v131 = vpack.c.bf16 %v128, %v127
    %v132 = vld [vmem:[%s3] sm:$0xf]
    %v133 = vld [vmem:[%s3 + $0x4] sm:$0xf]
    %v134 = vld [vmem:[%s3 + $0x8] sm:$0xf]
    %v135 = vld [vmem:[%s3 + $0xc] sm:$0xf]
    %v136 = vld [vmem:[%s3 + $0x10] sm:$0xf]
    %v137 = vld [vmem:[%s3 + $0x14] sm:$0xf]
    %v138 = vld [vmem:[%s3 + $0x18] sm:$0xf]
    %v139 = vld [vmem:[%s3 + $0x1c] sm:$0xf]
    %v140 = vld [vmem:[%s3 + $0x20] sm:$0xf]
    %v141 = vld [vmem:[%s3 + $0x24] sm:$0xf]
    %v142 = vld [vmem:[%s3 + $0x28] sm:$0xf]
    %v143 = vld [vmem:[%s3 + $0x2c] sm:$0xf]
    %v144 = vld [vmem:[%s3 + $0x30] sm:$0xf]
    %v145 = vld [vmem:[%s3 + $0x34] sm:$0xf]
    %v146 = vld [vmem:[%s3 + $0x38] sm:$0xf]
    %v147 = vld [vmem:[%s3 + $0x3c] sm:$0xf]
    %v164 = vunpack.c.l.b16 %v132
    %v165 = vunpack.c.l.b16 %v133
    %v166 = vunpack.c.l.b16 %v134
    %v167 = vunpack.c.l.b16 %v135
    %v168 = vunpack.c.l.b16 %v136
    %v169 = vunpack.c.l.b16 %v137
    %v170 = vunpack.c.l.b16 %v138
    %v171 = vunpack.c.l.b16 %v139
    %v172 = vunpack.c.l.b16 %v140
    %v173 = vunpack.c.l.b16 %v141
    %v174 = vunpack.c.l.b16 %v142
    %v175 = vunpack.c.l.b16 %v143
    %v176 = vunpack.c.l.b16 %v144
    %v177 = vunpack.c.l.b16 %v145
    %v178 = vunpack.c.l.b16 %v146
    %v179 = vunpack.c.l.b16 %v147
    %v180 = vpack.c.b16 %v165, %v164
    %v181 = vpack.c.b16 %v167, %v166
    %v182 = vpack.c.b16 %v169, %v168
    %v183 = vpack.c.b16 %v171, %v170
    %v184 = vpack.c.b16 %v173, %v172
    %v185 = vpack.c.b16 %v175, %v174
    %v186 = vpack.c.b16 %v177, %v176
    %v187 = vpack.c.b16 %v179, %v178
    %196 = vmatprep.subr.bf16.mxu0 0
    %197 = vmatpush1.bf16.msra.mxu0 %v180
    %198 = vmatprep.subr.bf16.mxu0 0
    %199 = vmatpush1.bf16.msra.mxu0 %v181
    %200 = vmatprep.subr.bf16.mxu0 0
    %201 = vmatpush1.bf16.msra.mxu0 %v182
    %202 = vmatprep.subr.bf16.mxu0 0
    %203 = vmatpush1.bf16.msra.mxu0 %v183
    %204 = vmatprep.subr.bf16.mxu0 0
    %205 = vmatpush1.bf16.msra.mxu0 %v184
    %206 = vmatprep.subr.bf16.mxu0 0
    %207 = vmatpush1.bf16.msra.mxu0 %v185
    %208 = vmatprep.subr.bf16.mxu0 0
    %209 = vmatpush1.bf16.msra.mxu0 %v186
    %210 = vmatprep.subr.bf16.mxu0 0
    %211 = vmatpush1.bf16.msra.mxu0 %v187
    %212 = vmatprep.subr.bf16.mxu0 0
    %213 = vmatpush1.bf16.msra.mxu0 0
    %214 = vmatprep.subr.bf16.mxu0 0
    %215 = vmatpush1.bf16.msra.mxu0 0
    %216 = vmatprep.subr.bf16.mxu0 0
    %217 = vmatpush1.bf16.msra.mxu0 0
    %218 = vmatprep.subr.bf16.mxu0 0
    %219 = vmatpush1.bf16.msra.mxu0 0
    %220 = vmatprep.subr.bf16.mxu0 0
    %221 = vmatpush1.bf16.msra.mxu0 0
    %222 = vmatprep.subr.bf16.mxu0 0
    %223 = vmatpush1.bf16.msra.mxu0 0
    %224 = vmatprep.subr.bf16.mxu0 0
    %225 = vmatpush1.bf16.msra.mxu0 0
    %226 = vmatprep.subr.bf16.mxu0 0
    %227 = vmatpush1.bf16.msra.mxu0 0
    %228 = vmatprep.mubr.bf16.mxu0 0
    %229 = vmatmul.mubr.bf16.gmra.mrb[0].mxu0 %v131
    %v230 = vpop.f32.mrb[0].mxu0
    %v231 = vadd.f32 0.0, %v230
    %v232 = vpop.f32.mrb[0].mxu0
    %v233 = vpop.f32.mrb[0].mxu0
    %v234 = vadd.f32 0.0, %v233
    %v235 = vpop.f32.mrb[0].mxu0
    %236 = vdwg.mxu0
    %v237 = vadd.f32 %v129, %v231
    %v238 = vadd.f32 %v130, %v234
    %239 = vst.msk [vmem:[#allocation2] sm:$0xff] %vm66, %v237
    %240 = vst.msk [vmem:[#allocation2 + $0x8] sm:$0xff] %vm66, %v238
    // Predicated region
    $region26: #{tpu_custom_call.1} parent=1 // pred_check
      %p241 = pneg %p22
    $region27: #{tpu_custom_call.1} parent=1 // pred_check_branch
      %243 = sbr.rel (%p241) target = $region29
    $region28: #{tpu_custom_call.1} parent=1 // pred_region
      %v244 = vld [vmem:[#allocation2] sm:$0xff]
      %v245 = vld [vmem:[#allocation2 + $0x8] sm:$0xff]
      %246 = vst.msk [vmem:[#allocation3] sm:$0xff] %vm66, %v244
      %247 = vst.msk [vmem:[#allocation3 + $0x8] sm:$0xff] %vm66, %v245
    $region29: #{tpu_custom_call.1} parent=1 // pred_fallthru
      _
    // Predicated region
    $region30: #{tpu_custom_call.1} parent=1 // pred_check
      _
    $region31: #{tpu_custom_call.1} parent=1 // pred_check_branch
      %249 = sbr.rel (0) target = $region33
    $region32: #{tpu_custom_call.1} parent=1 // pred_region
      %s251 = ssub.s32 256, 256
      %252 = vsyncadd [#allocation4], %s251
      %s253 = sshll.u32 [#allocation3], 4
      %s254 = int_to_ptr.vmem [resolvable:$true] %s253
      %259 = dma.vmem_to_hbm [thread:$0]  %s254, 256, %s5, [#allocation4], 128, 128, 8
    $region33: #{tpu_custom_call.1} parent=1 // pred_fallthru
      _
    // Predicated region
    $region34: #{tpu_custom_call.1} parent=1 // pred_check
      _
    $region35: #{tpu_custom_call.1} parent=1 // pred_check_branch
      %261 = sbr.rel (0) target = $region37
    $region36: #{tpu_custom_call.1} parent=1 // pred_region
      %262 = dma.done [#allocation4], 256
    $region37: #{tpu_custom_call.1} parent=1 // pred_fallthru
      _
    %263 = vsyncpa [#allocation4], 1

</llo_original>
